<compile_context>
chip_gen: v6e
topology: v6e:2x2x1
jax: 0.10.0
libtpu: 0.0.40
codegen_flags: <defaults>
</compile_context>

<pallas_src>
import functools

import jax
import jax.numpy as jnp
from jax.experimental import pallas as pl
from jax.experimental.pallas import tpu as pltpu


def _round_up(x, m):
    return (x + m - 1) // m * m


# ----------------------------------------------------------------------------
# Kernel
# ----------------------------------------------------------------------------
def _mlp_kernel(x_ref,
                w1_ref, b1_ref, w2_ref, b2_ref, w3_ref, b3_ref, w4_ref, b4_ref,
                wo_ref, bo_ref,
                o_ref):
    """Fused 5-matmul MLP on one batch tile.

    Weights are VMEM-resident (constant index_map); only x/out tiles stream.
    Matmuls run on the MXU in bf16 with f32 accumulation; folded-BN bias-add
    and ReLU stay in f32 on the VPU.  Dropout is identity (eval mode).
    """

    def layer(h_bf16, w_ref, b_ref):
        h = jnp.dot(h_bf16, w_ref[...], preferred_element_type=jnp.float32)
        h = jnp.maximum(h + b_ref[...], 0.0)           # folded BN+bias, ReLU
        return h.astype(jnp.bfloat16)                  # next MXU operand

    h = x_ref[...]                                     # bf16 batch tile
    h = layer(h, w1_ref, b1_ref)
    h = layer(h, w2_ref, b2_ref)
    h = layer(h, w3_ref, b3_ref)
    h = layer(h, w4_ref, b4_ref)
    out = jnp.dot(h, wo_ref[...], preferred_element_type=jnp.float32)
    o_ref[...] = out + bo_ref[...]


# ----------------------------------------------------------------------------
# Wrapper
# ----------------------------------------------------------------------------
def _choose_batch_tile(batch, in_pad, out_pad, param_bytes,
                       vmem_budget=40 << 20):
    """Largest batch tile whose double-buffered x/out tiles fit alongside the
    resident (double-counted for safety) weights under the VMEM budget."""
    if batch <= 512:
        return _round_up(batch, 8)
    row_bytes = 2 * (in_pad * 2 + out_pad * 4)   # 2x buffers, bf16 in / f32 out
    avail = max(vmem_budget - 2 * param_bytes, 1 << 20)
    tb = 512
    while tb > 128 and tb * row_bytes > avail:
        tb //= 2
    return tb


@functools.partial(jax.jit, static_argnames=("output_dim",))
def mlp_forward(x, kernel_params, *, output_dim):
    """x: [batch, input_dim] f32.  kernel_params: folded+padded tuple
    (w1,b1,w2,b2,w3,b3,w4,b4,wo,bo).  Returns [batch, output_dim] f32."""
    w1 = kernel_params[0]
    wo = kernel_params[-2]
    batch, in_dim = x.shape
    in_pad = w1.shape[0]
    hid_pad = w1.shape[1]
    out_pad = wo.shape[1]

    param_bytes = sum(int(p.size) * jnp.dtype(p.dtype).itemsize
                      for p in kernel_params)

    tb = _choose_batch_tile(batch, in_pad, out_pad, param_bytes)
    b_pad = _round_up(batch, tb)

    # Pad batch/features and cast the MXU operand to bf16 (halves x DMA bytes).
    xp = jnp.pad(x, ((0, b_pad - batch), (0, in_pad - in_dim))).astype(jnp.bfloat16)

    grid = (b_pad // tb,)

    def resident(shape):
        # Same block every grid step -> stays VMEM-resident, no re-DMA.
        return pl.BlockSpec(shape, lambda i: (0, 0))

    in_specs = [pl.BlockSpec((tb, in_pad), lambda i: (i, 0))]
    in_specs += [resident(p.shape) for p in kernel_params]
    out_spec = pl.BlockSpec((tb, out_pad), lambda i: (i, 0))

    # Advisory cost estimate (padded dims).
    flops = 2 * b_pad * (in_pad * hid_pad + 3 * hid_pad * hid_pad
                         + hid_pad * out_pad)
    bytes_accessed = int(xp.size) * 2 + param_bytes + b_pad * out_pad * 4

    # Explicit VMEM budget: resident weights + double-buffered x/out tiles,
    # 2x headroom, clamped to [32 MiB, 48 MiB] (valid on v5e/v6e/v7x).
    tile_bytes = 2 * (tb * in_pad * 2 + tb * out_pad * 4)
    vmem_limit = int(min(max(2 * (param_bytes + tile_bytes), 32 << 20), 48 << 20))

    out_padded = pl.pallas_call(
        _mlp_kernel,
        out_shape=jax.ShapeDtypeStruct((b_pad, out_pad), jnp.float32),
        grid=grid,
        in_specs=in_specs,
        out_specs=out_spec,
        compiler_params=pltpu.CompilerParams(
            dimension_semantics=("parallel",),
            vmem_limit_bytes=vmem_limit),
        cost_estimate=pl.CostEstimate(
            flops=flops, transcendentals=0, bytes_accessed=bytes_accessed),
    )(xp, *kernel_params)

    return out_padded[:batch, :output_dim]


# ----------------------------------------------------------------------------
# Parameter construction / folding
# ----------------------------------------------------------------------------
def make_raw_params(key, input_dim, hidden_dim, output_dim):
    """Synthetic torch-equivalent params. Weights stored [in, out] (= torch W.T)."""
    dims = [(input_dim, hidden_dim)] + [(hidden_dim, hidden_dim)] * 3
    keys = jax.random.split(key, 4 * len(dims) + 2)
    layers = []
    k = 0
    for fan_in, fan_out in dims:
        bound = 1.0 / float(fan_in) ** 0.5
        w = jax.random.uniform(keys[k], (fan_in, fan_out), jnp.float32,
                               -bound, bound); k += 1
        b = jax.random.uniform(keys[k], (fan_out,), jnp.float32,
                               -bound, bound); k += 1
        gamma = 1.0 + 0.1 * jax.random.normal(keys[k], (fan_out,), jnp.float32); k += 1
        beta = 0.1 * jax.random.normal(keys[k], (fan_out,), jnp.float32); k += 1
        running_mean = 0.05 * jnp.arange(fan_out, dtype=jnp.float32) / fan_out
        running_var = 1.0 + 0.1 * jnp.cos(jnp.arange(fan_out, dtype=jnp.float32))
        layers.append((w, b, gamma, beta, running_mean, running_var))
    bound = 1.0 / float(hidden_dim) ** 0.5
    wo = jax.random.uniform(keys[k], (hidden_dim, output_dim), jnp.float32,
                            -bound, bound); k += 1
    bo = jax.random.uniform(keys[k], (output_dim,), jnp.float32, -bound, bound)
    return layers, (wo, bo)


def prepare_kernel_params(layers, out_layer, use_batch_norm=True, eps=1e-5):
    """One-time fold of eval-mode BN + bias into W'/b', zero-pad feature dims
    to multiples of 128 (lane-dense MXU / unmasked stores), cast W to bf16."""

    def pad2(a, rows, cols):
        return jnp.pad(a, ((0, rows - a.shape[0]), (0, cols - a.shape[1])))

    params = []
    for (w, b, gamma, beta, mean, var) in layers:
        if use_batch_norm:
            scale = gamma * jax.lax.rsqrt(var + eps)
            shift = beta - mean * scale
        else:
            scale = jnp.ones_like(b)
            shift = jnp.zeros_like(b)
        w_f = w * scale[None, :]
        b_f = b * scale + shift
        r = _round_up(w.shape[0], 128)
        c = _round_up(w.shape[1], 128)
        params.append(pad2(w_f, r, c).astype(jnp.bfloat16))
        params.append(pad2(b_f[None, :], 1, c).astype(jnp.float32))

    wo, bo = out_layer
    r = _round_up(wo.shape[0], 128)
    c = _round_up(wo.shape[1], 128)
    params.append(pad2(wo, r, c).astype(jnp.bfloat16))
    params.append(pad2(bo[None, :], 1, c).astype(jnp.float32))
    return tuple(params)


def reference_forward(x, layers, out_layer, use_batch_norm=True, eps=1e-5):
    """Pure-JAX f32 reference of Model.forward in eval mode (no fold/pad)."""
    h = x
    for (w, b, gamma, beta, mean, var) in layers:
        h = h @ w + b
        if use_batch_norm:
            h = (h - mean) / jnp.sqrt(var + eps) * gamma + beta
        h = jnp.maximum(h, 0.0)
        # dropout: identity in eval mode
    wo, bo = out_layer
    return h @ wo + bo


# ----------------------------------------------------------------------------
# Self-test
# ----------------------------------------------------------------------------
if __name__ == "__main__":
    key = jax.random.PRNGKey(0)
    k_x, k_p = jax.random.split(key)

    batch = 8
    input_dim = 16
    hidden_dim = 32
    output_dim = 8
    use_batch_norm = True

    x = jax.random.normal(k_x, (batch, input_dim), jnp.float32)
    layers, out_layer = make_raw_params(k_p, input_dim, hidden_dim, output_dim)
    kernel_params = prepare_kernel_params(layers, out_layer, use_batch_norm)

    out = mlp_forward(x, kernel_params, output_dim=output_dim)
    out = jax.block_until_ready(out)

    ref = reference_forward(x, layers, out_layer, use_batch_norm)
    assert out.shape == (batch, output_dim)
    max_err = float(jnp.max(jnp.abs(out - ref)))
    # bf16 MXU operands vs f32 reference -> loose-but-meaningful tolerance.
    assert max_err < 5e-2, f"mismatch vs reference: max abs err {max_err}"

    print("KERNEL_OK")
</pallas_src>

<mosaic_0001>
module attributes {stable_mosaic.version = 11 : i64} {
  func.func @_mlp_kernel(%arg0: i32, %arg1: memref<8x128xbf16, #tpu.memory_space<vmem>>, %arg2: memref<128x128xbf16, #tpu.memory_space<vmem>>, %arg3: memref<1x128xf32, #tpu.memory_space<vmem>>, %arg4: memref<128x128xbf16, #tpu.memory_space<vmem>>, %arg5: memref<1x128xf32, #tpu.memory_space<vmem>>, %arg6: memref<128x128xbf16, #tpu.memory_space<vmem>>, %arg7: memref<1x128xf32, #tpu.memory_space<vmem>>, %arg8: memref<128x128xbf16, #tpu.memory_space<vmem>>, %arg9: memref<1x128xf32, #tpu.memory_space<vmem>>, %arg10: memref<128x128xbf16, #tpu.memory_space<vmem>>, %arg11: memref<1x128xf32, #tpu.memory_space<vmem>>, %arg12: memref<8x128xf32, #tpu.memory_space<vmem>>) attributes {dimension_semantics = [#tpu.dimension_semantics<parallel>], iteration_bounds = array<i64: 1>, scalar_prefetch = 0 : i64, scratch_operands = 0 : i64, tpu.core_type = #tpu.core_type<tc>, window_params = [{transform_indices = @transform_0, window_bounds = array<i64: 8, 128>}, {pipeline_mode = #tpu.pipeline_mode<synchronous>, transform_indices = @transform_1, window_bounds = array<i64: 128, 128>}, {pipeline_mode = #tpu.pipeline_mode<synchronous>, transform_indices = @transform_2, window_bounds = array<i64: 1, 128>}, {pipeline_mode = #tpu.pipeline_mode<synchronous>, transform_indices = @transform_3, window_bounds = array<i64: 128, 128>}, {pipeline_mode = #tpu.pipeline_mode<synchronous>, transform_indices = @transform_4, window_bounds = array<i64: 1, 128>}, {pipeline_mode = #tpu.pipeline_mode<synchronous>, transform_indices = @transform_5, window_bounds = array<i64: 128, 128>}, {pipeline_mode = #tpu.pipeline_mode<synchronous>, transform_indices = @transform_6, window_bounds = array<i64: 1, 128>}, {pipeline_mode = #tpu.pipeline_mode<synchronous>, transform_indices = @transform_7, window_bounds = array<i64: 128, 128>}, {pipeline_mode = #tpu.pipeline_mode<synchronous>, transform_indices = @transform_8, window_bounds = array<i64: 1, 128>}, {pipeline_mode = #tpu.pipeline_mode<synchronous>, transform_indices = @transform_9, window_bounds = array<i64: 128, 128>}, {pipeline_mode = #tpu.pipeline_mode<synchronous>, transform_indices = @transform_10, window_bounds = array<i64: 1, 128>}, {transform_indices = @transform_11, window_bounds = array<i64: 8, 128>}]} {
    %c0 = arith.constant 0 : index
    %c0_0 = arith.constant 0 : index
    %0 = vector.load %arg1[%c0, %c0_0] : memref<8x128xbf16, #tpu.memory_space<vmem>>, vector<8x128xbf16>
    %c0_1 = arith.constant 0 : index
    %c0_2 = arith.constant 0 : index
    %1 = vector.load %arg2[%c0_1, %c0_2] : memref<128x128xbf16, #tpu.memory_space<vmem>>, vector<128x128xbf16>
    %cst = arith.constant dense<0.000000e+00> : vector<8x128xf32>
    %2 = tpu.matmul %0, %1, %cst {dimension_numbers = #tpu.dot_dimension_numbers<[1], [0], [0], [1], [0, 0, 1, 1], [], []>} : vector<8x128xbf16>, vector<128x128xbf16>, vector<8x128xf32> -> vector<8x128xf32>
    %c0_3 = arith.constant 0 : index
    %c0_4 = arith.constant 0 : index
    %3 = vector.load %arg3[%c0_3, %c0_4] : memref<1x128xf32, #tpu.memory_space<vmem>>, vector<1x128xf32>
    %4 = vector.broadcast %3 : vector<1x128xf32> to vector<8x128xf32>
    %5 = arith.addf %2, %4 : vector<8x128xf32>
    %cst_5 = arith.constant 0.000000e+00 : f32
    %6 = vector.broadcast %cst_5 : f32 to vector<8x128xf32>
    %7 = arith.maximumf %5, %6 : vector<8x128xf32>
    %8 = arith.truncf %7 : vector<8x128xf32> to vector<8x128xbf16>
    %c0_6 = arith.constant 0 : index
    %c0_7 = arith.constant 0 : index
    %9 = vector.load %arg4[%c0_6, %c0_7] : memref<128x128xbf16, #tpu.memory_space<vmem>>, vector<128x128xbf16>
    %cst_8 = arith.constant dense<0.000000e+00> : vector<8x128xf32>
    %10 = tpu.matmul %8, %9, %cst_8 {dimension_numbers = #tpu.dot_dimension_numbers<[1], [0], [0], [1], [0, 0, 1, 1], [], []>} : vector<8x128xbf16>, vector<128x128xbf16>, vector<8x128xf32> -> vector<8x128xf32>
    %c0_9 = arith.constant 0 : index
    %c0_10 = arith.constant 0 : index
    %11 = vector.load %arg5[%c0_9, %c0_10] : memref<1x128xf32, #tpu.memory_space<vmem>>, vector<1x128xf32>
    %12 = vector.broadcast %11 : vector<1x128xf32> to vector<8x128xf32>
    %13 = arith.addf %10, %12 : vector<8x128xf32>
    %cst_11 = arith.constant 0.000000e+00 : f32
    %14 = vector.broadcast %cst_11 : f32 to vector<8x128xf32>
    %15 = arith.maximumf %13, %14 : vector<8x128xf32>
    %16 = arith.truncf %15 : vector<8x128xf32> to vector<8x128xbf16>
    %c0_12 = arith.constant 0 : index
    %c0_13 = arith.constant 0 : index
    %17 = vector.load %arg6[%c0_12, %c0_13] : memref<128x128xbf16, #tpu.memory_space<vmem>>, vector<128x128xbf16>
    %cst_14 = arith.constant dense<0.000000e+00> : vector<8x128xf32>
    %18 = tpu.matmul %16, %17, %cst_14 {dimension_numbers = #tpu.dot_dimension_numbers<[1], [0], [0], [1], [0, 0, 1, 1], [], []>} : vector<8x128xbf16>, vector<128x128xbf16>, vector<8x128xf32> -> vector<8x128xf32>
    %c0_15 = arith.constant 0 : index
    %c0_16 = arith.constant 0 : index
    %19 = vector.load %arg7[%c0_15, %c0_16] : memref<1x128xf32, #tpu.memory_space<vmem>>, vector<1x128xf32>
    %20 = vector.broadcast %19 : vector<1x128xf32> to vector<8x128xf32>
    %21 = arith.addf %18, %20 : vector<8x128xf32>
    %cst_17 = arith.constant 0.000000e+00 : f32
    %22 = vector.broadcast %cst_17 : f32 to vector<8x128xf32>
    %23 = arith.maximumf %21, %22 : vector<8x128xf32>
    %24 = arith.truncf %23 : vector<8x128xf32> to vector<8x128xbf16>
    %c0_18 = arith.constant 0 : index
    %c0_19 = arith.constant 0 : index
    %25 = vector.load %arg8[%c0_18, %c0_19] : memref<128x128xbf16, #tpu.memory_space<vmem>>, vector<128x128xbf16>
    %cst_20 = arith.constant dense<0.000000e+00> : vector<8x128xf32>
    %26 = tpu.matmul %24, %25, %cst_20 {dimension_numbers = #tpu.dot_dimension_numbers<[1], [0], [0], [1], [0, 0, 1, 1], [], []>} : vector<8x128xbf16>, vector<128x128xbf16>, vector<8x128xf32> -> vector<8x128xf32>
    %c0_21 = arith.constant 0 : index
    %c0_22 = arith.constant 0 : index
    %27 = vector.load %arg9[%c0_21, %c0_22] : memref<1x128xf32, #tpu.memory_space<vmem>>, vector<1x128xf32>
    %28 = vector.broadcast %27 : vector<1x128xf32> to vector<8x128xf32>
    %29 = arith.addf %26, %28 : vector<8x128xf32>
    %cst_23 = arith.constant 0.000000e+00 : f32
    %30 = vector.broadcast %cst_23 : f32 to vector<8x128xf32>
    %31 = arith.maximumf %29, %30 : vector<8x128xf32>
    %32 = arith.truncf %31 : vector<8x128xf32> to vector<8x128xbf16>
    %c0_24 = arith.constant 0 : index
    %c0_25 = arith.constant 0 : index
    %33 = vector.load %arg10[%c0_24, %c0_25] : memref<128x128xbf16, #tpu.memory_space<vmem>>, vector<128x128xbf16>
    %cst_26 = arith.constant dense<0.000000e+00> : vector<8x128xf32>
    %34 = tpu.matmul %32, %33, %cst_26 {dimension_numbers = #tpu.dot_dimension_numbers<[1], [0], [0], [1], [0, 0, 1, 1], [], []>} : vector<8x128xbf16>, vector<128x128xbf16>, vector<8x128xf32> -> vector<8x128xf32>
    %c0_27 = arith.constant 0 : index
    %c0_28 = arith.constant 0 : index
    %35 = vector.load %arg11[%c0_27, %c0_28] : memref<1x128xf32, #tpu.memory_space<vmem>>, vector<1x128xf32>
    %36 = vector.broadcast %35 : vector<1x128xf32> to vector<8x128xf32>
    %37 = arith.addf %34, %36 : vector<8x128xf32>
    %c0_29 = arith.constant 0 : index
    %c0_30 = arith.constant 0 : index
    %38 = vector.load %arg12[%c0_29, %c0_30] : memref<8x128xf32, #tpu.memory_space<vmem>>, vector<8x128xf32>
    tpu.vector_store %arg12[%c0_29, %c0_30], %37 {strides = array<i32>} : memref<8x128xf32, #tpu.memory_space<vmem>>, vector<8x128xf32>,
    return
  }
  func.func @transform_0(%arg0: i32) -> (i32, i32) {
    %c0_i32 = arith.constant 0 : i32
    %c0_i32_0 = arith.constant 0 : i32
    return %arg0, %c0_i32 : i32, i32
  }
  func.func @transform_1(%arg0: i32) -> (i32, i32) {
    %c0_i32 = arith.constant 0 : i32
    %c0_i32_0 = arith.constant 0 : i32
    %c0_i32_1 = arith.constant 0 : i32
    return %c0_i32, %c0_i32_0 : i32, i32
  }
  func.func @transform_2(%arg0: i32) -> (i32, i32) {
    %c0_i32 = arith.constant 0 : i32
    %c0_i32_0 = arith.constant 0 : i32
    %c0_i32_1 = arith.constant 0 : i32
    return %c0_i32, %c0_i32_0 : i32, i32
  }
  func.func @transform_3(%arg0: i32) -> (i32, i32) {
    %c0_i32 = arith.constant 0 : i32
    %c0_i32_0 = arith.constant 0 : i32
    %c0_i32_1 = arith.constant 0 : i32
    return %c0_i32, %c0_i32_0 : i32, i32
  }
  func.func @transform_4(%arg0: i32) -> (i32, i32) {
    %c0_i32 = arith.constant 0 : i32
    %c0_i32_0 = arith.constant 0 : i32
    %c0_i32_1 = arith.constant 0 : i32
    return %c0_i32, %c0_i32_0 : i32, i32
  }
  func.func @transform_5(%arg0: i32) -> (i32, i32) {
    %c0_i32 = arith.constant 0 : i32
    %c0_i32_0 = arith.constant 0 : i32
    %c0_i32_1 = arith.constant 0 : i32
    return %c0_i32, %c0_i32_0 : i32, i32
  }
  func.func @transform_6(%arg0: i32) -> (i32, i32) {
    %c0_i32 = arith.constant 0 : i32
    %c0_i32_0 = arith.constant 0 : i32
    %c0_i32_1 = arith.constant 0 : i32
    return %c0_i32, %c0_i32_0 : i32, i32
  }
  func.func @transform_7(%arg0: i32) -> (i32, i32) {
    %c0_i32 = arith.constant 0 : i32
    %c0_i32_0 = arith.constant 0 : i32
    %c0_i32_1 = arith.constant 0 : i32
    return %c0_i32, %c0_i32_0 : i32, i32
  }
  func.func @transform_8(%arg0: i32) -> (i32, i32) {
    %c0_i32 = arith.constant 0 : i32
    %c0_i32_0 = arith.constant 0 : i32
    %c0_i32_1 = arith.constant 0 : i32
    return %c0_i32, %c0_i32_0 : i32, i32
  }
  func.func @transform_9(%arg0: i32) -> (i32, i32) {
    %c0_i32 = arith.constant 0 : i32
    %c0_i32_0 = arith.constant 0 : i32
    %c0_i32_1 = arith.constant 0 : i32
    return %c0_i32, %c0_i32_0 : i32, i32
  }
  func.func @transform_10(%arg0: i32) -> (i32, i32) {
    %c0_i32 = arith.constant 0 : i32
    %c0_i32_0 = arith.constant 0 : i32
    %c0_i32_1 = arith.constant 0 : i32
    return %c0_i32, %c0_i32_0 : i32, i32
  }
  func.func @transform_11(%arg0: i32) -> (i32, i32) {
    %c0_i32 = arith.constant 0 : i32
    %c0_i32_0 = arith.constant 0 : i32
    return %arg0, %c0_i32 : i32, i32
  }
}

</mosaic_0001>

<llo_original>
// kernel: mlp_forward.1
$region0: #{mlp_forward.1}
  #allocation0 [shape = 'u32[]', space=smem, size = 0x4, offset = 0x4, fixed_abs, tag = 'smem constant byte address 0x4 - core index']
  #allocation1 [shape = 'u32[144,128]{1,0:T(1,128)}', space=vmem, size = 0x12000, scoped, tag = 'internal scratch']
  %s0 = inlined_call_operand.vmem [shape: bf16[8,128], index: 0, kind: input, shape index: {}]
  %s1 = inlined_call_operand.hbm [shape: bf16[128,128], index: 1, kind: input, shape index: {}]
  %s2 = inlined_call_operand.vmem [shape: f32[1,128], index: 2, kind: input, shape index: {}]
  %s3 = inlined_call_operand.hbm [shape: bf16[128,128], index: 3, kind: input, shape index: {}]
  %s4 = inlined_call_operand.vmem [shape: f32[1,128], index: 4, kind: input, shape index: {}]
  %s5 = inlined_call_operand.hbm [shape: bf16[128,128], index: 5, kind: input, shape index: {}]
  %s6 = inlined_call_operand.vmem [shape: f32[1,128], index: 6, kind: input, shape index: {}]
  %s7 = inlined_call_operand.hbm [shape: bf16[128,128], index: 7, kind: input, shape index: {}]
  %s8 = inlined_call_operand.vmem [shape: f32[1,128], index: 8, kind: input, shape index: {}]
  %s9 = inlined_call_operand.hbm [shape: bf16[128,128], index: 9, kind: input, shape index: {}]
  %s10 = inlined_call_operand.vmem [shape: f32[1,128], index: 10, kind: input, shape index: {}]
  %s11 = inlined_call_operand.hbm [shape: f32[8,128], index: 11, kind: output, shape index: {}]
  %s12 = sld [smem:[#allocation0]]
  $region74: #{mlp_forward.1} parent=0
    _
  %s14 = ssub.s32 1, %s12
  %s15 = scalar_select 0, %s14, %s12
  $region1: #{mlp_forward.1} parent=0
    #allocation2 [shape = 'u8[32768]{0}', space=vmem, size = 0x8000, scoped, tag = 'input window, operand 1, single buffered']
    #allocation3 [shape = 's32[1]{0}', space=sflag, size = 0x4, scoped, tag = 'scoped memory for mlp_forward.1']
    #allocation4 [shape = 's32[1]{0}', space=sflag, size = 0x4, scoped, tag = 'scoped memory for mlp_forward.1']
    #allocation5 [shape = 'u8[32768]{0}', space=vmem, size = 0x8000, scoped, tag = 'input window, operand 3, single buffered']
    #allocation6 [shape = 's32[1]{0}', space=sflag, size = 0x4, scoped, tag = 'scoped memory for mlp_forward.1']
    #allocation7 [shape = 'u8[32768]{0}', space=vmem, size = 0x8000, scoped, tag = 'input window, operand 5, single buffered']
    #allocation8 [shape = 'u8[32768]{0}', space=vmem, size = 0x8000, scoped, tag = 'input window, operand 7, single buffered']
    #allocation9 [shape = 's32[1]{0}', space=sflag, size = 0x4, scoped, tag = 'scoped memory for mlp_forward.1']
    #allocation10 [shape = 'u8[32768]{0}', space=vmem, size = 0x8000, scoped, tag = 'input window, operand 9, single buffered']
    #allocation11 [shape = 'u8[4096]{0}', space=vmem, size = 0x1000, scoped, tag = 'output window, operand 0, single buffered']
    %16 = vsyncpa [#allocation3], 0
    %17 = vsyncpa [#allocation6], 0
    %18 = vsyncpa [#allocation9], 0
    %19 = vsyncpa [#allocation4], 0
    // Predicated region
    $region2: #{mlp_forward.1} parent=1 // pred_check
      _
    $region3: #{mlp_forward.1} parent=1 // pred_check_branch
      %21 = sbr.rel (0) target = $region5
    $region4: #{mlp_forward.1} parent=1 // pred_region
      _
    $region5: #{mlp_forward.1} parent=1 // pred_fallthru
      _
    // Predicated region
    $region6: #{mlp_forward.1} parent=1 // pred_check
      _
    $region7: #{mlp_forward.1} parent=1 // pred_check_branch
      %23 = sbr.rel (0) target = $region9
    $region8: #{mlp_forward.1} parent=1 // pred_region
      %s25 = ssub.s32 1024, 1024
      %26 = vsyncadd [#allocation3], %s25
      %s27 = sshll.u32 [#allocation2], 4
      %s28 = int_to_ptr.vmem [resolvable:$true] %s27
      %33 = dma.hbm_to_vmem [thread:$0]  %s1, 1024, %s28, [#allocation3], 64, 64, 4
    $region9: #{mlp_forward.1} parent=1 // pred_fallthru
      _
    // Predicated region
    $region10: #{mlp_forward.1} parent=1 // pred_check
      _
    $region11: #{mlp_forward.1} parent=1 // pred_check_branch
      %35 = sbr.rel (0) target = $region13
    $region12: #{mlp_forward.1} parent=1 // pred_region
      _
    $region13: #{mlp_forward.1} parent=1 // pred_fallthru
      _
    // Predicated region
    $region14: #{mlp_forward.1} parent=1 // pred_check
      _
    $region15: #{mlp_forward.1} parent=1 // pred_check_branch
      %37 = sbr.rel (0) target = $region17
    $region16: #{mlp_forward.1} parent=1 // pred_region
      %s39 = ssub.s32 1024, 1024
      %40 = vsyncadd [#allocation6], %s39
      %s41 = sshll.u32 [#allocation5], 4
      %s42 = int_to_ptr.vmem [resolvable:$true] %s41
      %47 = dma.hbm_to_vmem [thread:$0]  %s3, 1024, %s42, [#allocation6], 64, 64, 4
    $region17: #{mlp_forward.1} parent=1 // pred_fallthru
      _
    // Predicated region
    $region18: #{mlp_forward.1} parent=1 // pred_check
      _
    $region19: #{mlp_forward.1} parent=1 // pred_check_branch
      %49 = sbr.rel (0) target = $region21
    $region20: #{mlp_forward.1} parent=1 // pred_region
      _
    $region21: #{mlp_forward.1} parent=1 // pred_fallthru
      _
    // Predicated region
    $region22: #{mlp_forward.1} parent=1 // pred_check
      _
    $region23: #{mlp_forward.1} parent=1 // pred_check_branch
      %51 = sbr.rel (0) target = $region25
    $region24: #{mlp_forward.1} parent=1 // pred_region
      %s53 = ssub.s32 1024, 1024
      %54 = vsyncadd [#allocation6], %s53
      %s55 = sshll.u32 [#allocation7], 4
      %s56 = int_to_ptr.vmem [resolvable:$true] %s55
      %61 = dma.hbm_to_vmem [thread:$0]  %s5, 1024, %s56, [#allocation6], 64, 64, 4
    $region25: #{mlp_forward.1} parent=1 // pred_fallthru
      _
    // Predicated region
    $region26: #{mlp_forward.1} parent=1 // pred_check
      _
    $region27: #{mlp_forward.1} parent=1 // pred_check_branch
      %63 = sbr.rel (0) target = $region29
    $region28: #{mlp_forward.1} parent=1 // pred_region
      _
    $region29: #{mlp_forward.1} parent=1 // pred_fallthru
      _
    // Predicated region
    $region30: #{mlp_forward.1} parent=1 // pred_check
      _
    $region31: #{mlp_forward.1} parent=1 // pred_check_branch
      %65 = sbr.rel (0) target = $region33
    $region32: #{mlp_forward.1} parent=1 // pred_region
      %s67 = ssub.s32 1024, 1024
      %68 = vsyncadd [#allocation9], %s67
      %s69 = sshll.u32 [#allocation8], 4
      %s70 = int_to_ptr.vmem [resolvable:$true] %s69
      %75 = dma.hbm_to_vmem [thread:$0]  %s7, 1024, %s70, [#allocation9], 64, 64, 4
    $region33: #{mlp_forward.1} parent=1 // pred_fallthru
      _
    // Predicated region
    $region34: #{mlp_forward.1} parent=1 // pred_check
      _
    $region35: #{mlp_forward.1} parent=1 // pred_check_branch
      %77 = sbr.rel (0) target = $region37
    $region36: #{mlp_forward.1} parent=1 // pred_region
      _
    $region37: #{mlp_forward.1} parent=1 // pred_fallthru
      _
    // Predicated region
    $region38: #{mlp_forward.1} parent=1 // pred_check
      _
    $region39: #{mlp_forward.1} parent=1 // pred_check_branch
      %79 = sbr.rel (0) target = $region41
    $region40: #{mlp_forward.1} parent=1 // pred_region
      %s81 = ssub.s32 1024, 1024
      %82 = vsyncadd [#allocation9], %s81
      %s83 = sshll.u32 [#allocation10], 4
      %s84 = int_to_ptr.vmem [resolvable:$true] %s83
      %89 = dma.hbm_to_vmem [thread:$0]  %s9, 1024, %s84, [#allocation9], 64, 64, 4
    $region41: #{mlp_forward.1} parent=1 // pred_fallthru
      _
    // Predicated region
    $region42: #{mlp_forward.1} parent=1 // pred_check
      _
    $region43: #{mlp_forward.1} parent=1 // pred_check_branch
      %91 = sbr.rel (0) target = $region45
    $region44: #{mlp_forward.1} parent=1 // pred_region
      _
    $region45: #{mlp_forward.1} parent=1 // pred_fallthru
      _
    // Predicated region
    $region46: #{mlp_forward.1} parent=1 // pred_check
      _
    $region47: #{mlp_forward.1} parent=1 // pred_check_branch
      %93 = sbr.rel (0) target = $region49
    $region48: #{mlp_forward.1} parent=1 // pred_region
      %94 = dma.done [#allocation3], 1024
    $region49: #{mlp_forward.1} parent=1 // pred_fallthru
      _
    // Predicated region
    $region50: #{mlp_forward.1} parent=1 // pred_check
      _
    $region51: #{mlp_forward.1} parent=1 // pred_check_branch
      %96 = sbr.rel (0) target = $region53
    $region52: #{mlp_forward.1} parent=1 // pred_region
      %97 = dma.done [#allocation6], 1024
    $region53: #{mlp_forward.1} parent=1 // pred_fallthru
      _
    // Predicated region
    $region54: #{mlp_forward.1} parent=1 // pred_check
      _
    $region55: #{mlp_forward.1} parent=1 // pred_check_branch
      %99 = sbr.rel (0) target = $region57
    $region56: #{mlp_forward.1} parent=1 // pred_region
      %100 = dma.done [#allocation6], 1024
    $region57: #{mlp_forward.1} parent=1 // pred_fallthru
      _
    // Predicated region
    $region58: #{mlp_forward.1} parent=1 // pred_check
      _
    $region59: #{mlp_forward.1} parent=1 // pred_check_branch
      %102 = sbr.rel (0) target = $region61
    $region60: #{mlp_forward.1} parent=1 // pred_region
      %103 = dma.done [#allocation9], 1024
    $region61: #{mlp_forward.1} parent=1 // pred_fallthru
      _
    // Predicated region
    $region62: #{mlp_forward.1} parent=1 // pred_check
      _
    $region63: #{mlp_forward.1} parent=1 // pred_check_branch
      %105 = sbr.rel (0) target = $region65
    $region64: #{mlp_forward.1} parent=1 // pred_region
      %106 = dma.done [#allocation9], 1024
    $region65: #{mlp_forward.1} parent=1 // pred_fallthru
      _
    %v108 = vld [vmem:[%s0] sm:$0xf]
    %v109 = vld [vmem:[#allocation2] sm:$0xf]
    %v110 = vld [vmem:[#allocation2 + $0x4] sm:$0xf]
    %v111 = vld [vmem:[#allocation2 + $0x8] sm:$0xf]
    %v112 = vld [vmem:[#allocation2 + $0xc] sm:$0xf]
    %v113 = vld [vmem:[#allocation2 + $0x10] sm:$0xf]
    %v114 = vld [vmem:[#allocation2 + $0x14] sm:$0xf]
    %v115 = vld [vmem:[#allocation2 + $0x18] sm:$0xf]
    %v116 = vld [vmem:[#allocation2 + $0x1c] sm:$0xf]
    %v117 = vld [vmem:[#allocation2 + $0x20] sm:$0xf]
    %v118 = vld [vmem:[#allocation2 + $0x24] sm:$0xf]
    %v119 = vld [vmem:[#allocation2 + $0x28] sm:$0xf]
    %v120 = vld [vmem:[#allocation2 + $0x2c] sm:$0xf]
    %v121 = vld [vmem:[#allocation2 + $0x30] sm:$0xf]
    %v122 = vld [vmem:[#allocation2 + $0x34] sm:$0xf]
    %v123 = vld [vmem:[#allocation2 + $0x38] sm:$0xf]
    %v124 = vld [vmem:[#allocation2 + $0x3c] sm:$0xf]
    %v125 = vld [vmem:[%s2] sm:$0x1]
    %v127 = vlaneseq
    %v128 = vshrl.u32 %v127, 7
    %v129 = vsub.s32 0, %v128
    %v130 = vrot.slane %v125, %v129
    %v148 = vunpack.c.l.b16 %v109
    %v149 = vunpack.c.l.b16 %v110
    %v150 = vunpack.c.l.b16 %v111
    %v151 = vunpack.c.l.b16 %v112
    %v152 = vunpack.c.l.b16 %v113
    %v153 = vunpack.c.l.b16 %v114
    %v154 = vunpack.c.l.b16 %v115
    %v155 = vunpack.c.l.b16 %v116
    %v156 = vunpack.c.l.b16 %v117
    %v157 = vunpack.c.l.b16 %v118
    %v158 = vunpack.c.l.b16 %v119
    %v159 = vunpack.c.l.b16 %v120
    %v160 = vunpack.c.l.b16 %v121
    %v161 = vunpack.c.l.b16 %v122
    %v162 = vunpack.c.l.b16 %v123
    %v163 = vunpack.c.l.b16 %v124
    %v164 = vpack.c.b16 %v149, %v148
    %v165 = vpack.c.b16 %v151, %v150
    %v166 = vpack.c.b16 %v153, %v152
    %v167 = vpack.c.b16 %v155, %v154
    %v168 = vpack.c.b16 %v157, %v156
    %v169 = vpack.c.b16 %v159, %v158
    %v170 = vpack.c.b16 %v161, %v160
    %v171 = vpack.c.b16 %v163, %v162
    %180 = vmatprep.subr.bf16.mxu0 0
    %181 = vmatpush1.bf16.msra.mxu0 %v171
    %182 = vmatprep.subr.bf16.mxu0 0
    %183 = vmatpush1.bf16.msra.mxu0 %v170
    %184 = vmatprep.subr.bf16.mxu0 0
    %185 = vmatpush1.bf16.msra.mxu0 %v169
    %186 = vmatprep.subr.bf16.mxu0 0
    %187 = vmatpush1.bf16.msra.mxu0 %v168
    %188 = vmatprep.subr.bf16.mxu0 0
    %189 = vmatpush1.bf16.msra.mxu0 %v167
    %190 = vmatprep.subr.bf16.mxu0 0
    %191 = vmatpush1.bf16.msra.mxu0 %v166
    %192 = vmatprep.subr.bf16.mxu0 0
    %193 = vmatpush1.bf16.msra.mxu0 %v165
    %194 = vmatprep.subr.bf16.mxu0 0
    %195 = vmatpush1.bf16.msra.mxu0 %v164
    %196 = vmatprep.subr.bf16.mxu0 0
    %197 = vmatpush2.bf16.msra.mxu0 0
    %198 = vmatprep.subr.bf16.mxu0 0
    %199 = vmatpush2.bf16.msra.mxu0 0
    %200 = vmatprep.subr.bf16.mxu0 0
    %201 = vmatpush2.bf16.msra.mxu0 0
    %202 = vmatprep.subr.bf16.mxu0 0
    %203 = vmatpush2.bf16.msra.mxu0 0
    %204 = vmatprep.subr.bf16.mxu0 0
    %205 = vmatpush2.bf16.msra.mxu0 0
    %206 = vmatprep.subr.bf16.mxu0 0
    %207 = vmatpush2.bf16.msra.mxu0 0
    %208 = vmatprep.subr.bf16.mxu0 0
    %209 = vmatpush2.bf16.msra.mxu0 0
    %210 = vmatprep.subr.bf16.mxu0 0
    %211 = vmatpush2.bf16.msra.mxu0 0
    %212 = vmatprep.mubr.bf16.mxu0 0
    %213 = vmatmul.mubr.bf16.gmra.mxu0 %v108
    %v214 = vpop.f32.mrf.mxu0
    %v215 = vadd.f32 %v130, %v214
    %v216 = vpop.f32.mrf.mxu0
    %v217 = vpop.f32.mrf.mxu0
    %v218 = vpop.f32.mrf.mxu0
    %219 = vdwg.mxu0
    %v220 = vmax.f32 %v215, 0.0
    %v221 = vpack.c.bf16 %v220, %v220
    %v222 = vld [vmem:[#allocation5] sm:$0xf]
    %v223 = vld [vmem:[#allocation5 + $0x4] sm:$0xf]
    %v224 = vld [vmem:[#allocation5 + $0x8] sm:$0xf]
    %v225 = vld [vmem:[#allocation5 + $0xc] sm:$0xf]
    %v226 = vld [vmem:[#allocation5 + $0x10] sm:$0xf]
    %v227 = vld [vmem:[#allocation5 + $0x14] sm:$0xf]
    %v228 = vld [vmem:[#allocation5 + $0x18] sm:$0xf]
    %v229 = vld [vmem:[#allocation5 + $0x1c] sm:$0xf]
    %v230 = vld [vmem:[#allocation5 + $0x20] sm:$0xf]
    %v231 = vld [vmem:[#allocation5 + $0x24] sm:$0xf]
    %v232 = vld [vmem:[#allocation5 + $0x28] sm:$0xf]
    %v233 = vld [vmem:[#allocation5 + $0x2c] sm:$0xf]
    %v234 = vld [vmem:[#allocation5 + $0x30] sm:$0xf]
    %v235 = vld [vmem:[#allocation5 + $0x34] sm:$0xf]
    %v236 = vld [vmem:[#allocation5 + $0x38] sm:$0xf]
    %v237 = vld [vmem:[#allocation5 + $0x3c] sm:$0xf]
    %v238 = vld [vmem:[%s4] sm:$0x1]
    %v240 = vlaneseq
    %v241 = vshrl.u32 %v240, 7
    %v242 = vsub.s32 0, %v241
    %v243 = vrot.slane %v238, %v242
    %v261 = vunpack.c.l.b16 %v222
    %v262 = vunpack.c.l.b16 %v223
    %v263 = vunpack.c.l.b16 %v224
    %v264 = vunpack.c.l.b16 %v225
    %v265 = vunpack.c.l.b16 %v226
    %v266 = vunpack.c.l.b16 %v227
    %v267 = vunpack.c.l.b16 %v228
    %v268 = vunpack.c.l.b16 %v229
    %v269 = vunpack.c.l.b16 %v230
    %v270 = vunpack.c.l.b16 %v231
    %v271 = vunpack.c.l.b16 %v232
    %v272 = vunpack.c.l.b16 %v233
    %v273 = vunpack.c.l.b16 %v234
    %v274 = vunpack.c.l.b16 %v235
    %v275 = vunpack.c.l.b16 %v236
    %v276 = vunpack.c.l.b16 %v237
    %v277 = vpack.c.b16 %v262, %v261
    %v278 = vpack.c.b16 %v264, %v263
    %v279 = vpack.c.b16 %v266, %v265
    %v280 = vpack.c.b16 %v268, %v267
    %v281 = vpack.c.b16 %v270, %v269
    %v282 = vpack.c.b16 %v272, %v271
    %v283 = vpack.c.b16 %v274, %v273
    %v284 = vpack.c.b16 %v276, %v275
    %293 = vmatprep.subr.bf16.mxu0 0
    %294 = vmatpush1.bf16.msra.mxu0 %v284
    %295 = vmatprep.subr.bf16.mxu0 0
    %296 = vmatpush1.bf16.msra.mxu0 %v283
    %297 = vmatprep.subr.bf16.mxu0 0
    %298 = vmatpush1.bf16.msra.mxu0 %v282
    %299 = vmatprep.subr.bf16.mxu0 0
    %300 = vmatpush1.bf16.msra.mxu0 %v281
    %301 = vmatprep.subr.bf16.mxu0 0
    %302 = vmatpush1.bf16.msra.mxu0 %v280
    %303 = vmatprep.subr.bf16.mxu0 0
    %304 = vmatpush1.bf16.msra.mxu0 %v279
    %305 = vmatprep.subr.bf16.mxu0 0
    %306 = vmatpush1.bf16.msra.mxu0 %v278
    %307 = vmatprep.subr.bf16.mxu0 0
    %308 = vmatpush1.bf16.msra.mxu0 %v277
    %309 = vmatprep.subr.bf16.mxu0 0
    %310 = vmatpush2.bf16.msra.mxu0 0
    %311 = vmatprep.subr.bf16.mxu0 0
    %312 = vmatpush2.bf16.msra.mxu0 0
    %313 = vmatprep.subr.bf16.mxu0 0
    %314 = vmatpush2.bf16.msra.mxu0 0
    %315 = vmatprep.subr.bf16.mxu0 0
    %316 = vmatpush2.bf16.msra.mxu0 0
    %317 = vmatprep.subr.bf16.mxu0 0
    %318 = vmatpush2.bf16.msra.mxu0 0
    %319 = vmatprep.subr.bf16.mxu0 0
    %320 = vmatpush2.bf16.msra.mxu0 0
    %321 = vmatprep.subr.bf16.mxu0 0
    %322 = vmatpush2.bf16.msra.mxu0 0
    %323 = vmatprep.subr.bf16.mxu0 0
    %324 = vmatpush2.bf16.msra.mxu0 0
    %325 = vmatprep.mubr.bf16.mxu0 0
    %326 = vmatmul.mubr.bf16.gmra.mxu0 %v221
    %v327 = vpop.f32.mrf.mxu0
    %v328 = vadd.f32 %v243, %v327
    %v329 = vpop.f32.mrf.mxu0
    %v330 = vpop.f32.mrf.mxu0
    %v331 = vpop.f32.mrf.mxu0
    %332 = vdwg.mxu0
    %v333 = vmax.f32 %v328, 0.0
    %v334 = vpack.c.bf16 %v333, %v333
    %v335 = vld [vmem:[#allocation7] sm:$0xf]
    %v336 = vld [vmem:[#allocation7 + $0x4] sm:$0xf]
    %v337 = vld [vmem:[#allocation7 + $0x8] sm:$0xf]
    %v338 = vld [vmem:[#allocation7 + $0xc] sm:$0xf]
    %v339 = vld [vmem:[#allocation7 + $0x10] sm:$0xf]
    %v340 = vld [vmem:[#allocation7 + $0x14] sm:$0xf]
    %v341 = vld [vmem:[#allocation7 + $0x18] sm:$0xf]
    %v342 = vld [vmem:[#allocation7 + $0x1c] sm:$0xf]
    %v343 = vld [vmem:[#allocation7 + $0x20] sm:$0xf]
    %v344 = vld [vmem:[#allocation7 + $0x24] sm:$0xf]
    %v345 = vld [vmem:[#allocation7 + $0x28] sm:$0xf]
    %v346 = vld [vmem:[#allocation7 + $0x2c] sm:$0xf]
    %v347 = vld [vmem:[#allocation7 + $0x30] sm:$0xf]
    %v348 = vld [vmem:[#allocation7 + $0x34] sm:$0xf]
    %v349 = vld [vmem:[#allocation7 + $0x38] sm:$0xf]
    %v350 = vld [vmem:[#allocation7 + $0x3c] sm:$0xf]
    %v351 = vld [vmem:[%s6] sm:$0x1]
    %v353 = vlaneseq
    %v354 = vshrl.u32 %v353, 7
    %v355 = vsub.s32 0, %v354
    %v356 = vrot.slane %v351, %v355
    %v374 = vunpack.c.l.b16 %v335
    %v375 = vunpack.c.l.b16 %v336
    %v376 = vunpack.c.l.b16 %v337
    %v377 = vunpack.c.l.b16 %v338
    %v378 = vunpack.c.l.b16 %v339
    %v379 = vunpack.c.l.b16 %v340
    %v380 = vunpack.c.l.b16 %v341
    %v381 = vunpack.c.l.b16 %v342
    %v382 = vunpack.c.l.b16 %v343
    %v383 = vunpack.c.l.b16 %v344
    %v384 = vunpack.c.l.b16 %v345
    %v385 = vunpack.c.l.b16 %v346
    %v386 = vunpack.c.l.b16 %v347
    %v387 = vunpack.c.l.b16 %v348
    %v388 = vunpack.c.l.b16 %v349
    %v389 = vunpack.c.l.b16 %v350
    %v390 = vpack.c.b16 %v375, %v374
    %v391 = vpack.c.b16 %v377, %v376
    %v392 = vpack.c.b16 %v379, %v378
    %v393 = vpack.c.b16 %v381, %v380
    %v394 = vpack.c.b16 %v383, %v382
    %v395 = vpack.c.b16 %v385, %v384
    %v396 = vpack.c.b16 %v387, %v386
    %v397 = vpack.c.b16 %v389, %v388
    %406 = vmatprep.subr.bf16.mxu0 0
    %407 = vmatpush1.bf16.msra.mxu0 %v397
    %408 = vmatprep.subr.bf16.mxu0 0
    %409 = vmatpush1.bf16.msra.mxu0 %v396
    %410 = vmatprep.subr.bf16.mxu0 0
    %411 = vmatpush1.bf16.msra.mxu0 %v395
    %412 = vmatprep.subr.bf16.mxu0 0
    %413 = vmatpush1.bf16.msra.mxu0 %v394
    %414 = vmatprep.subr.bf16.mxu0 0
    %415 = vmatpush1.bf16.msra.mxu0 %v393
    %416 = vmatprep.subr.bf16.mxu0 0
    %417 = vmatpush1.bf16.msra.mxu0 %v392
    %418 = vmatprep.subr.bf16.mxu0 0
    %419 = vmatpush1.bf16.msra.mxu0 %v391
    %420 = vmatprep.subr.bf16.mxu0 0
    %421 = vmatpush1.bf16.msra.mxu0 %v390
    %422 = vmatprep.subr.bf16.mxu0 0
    %423 = vmatpush2.bf16.msra.mxu0 0
    %424 = vmatprep.subr.bf16.mxu0 0
    %425 = vmatpush2.bf16.msra.mxu0 0
    %426 = vmatprep.subr.bf16.mxu0 0
    %427 = vmatpush2.bf16.msra.mxu0 0
    %428 = vmatprep.subr.bf16.mxu0 0
    %429 = vmatpush2.bf16.msra.mxu0 0
    %430 = vmatprep.subr.bf16.mxu0 0
    %431 = vmatpush2.bf16.msra.mxu0 0
    %432 = vmatprep.subr.bf16.mxu0 0
    %433 = vmatpush2.bf16.msra.mxu0 0
    %434 = vmatprep.subr.bf16.mxu0 0
    %435 = vmatpush2.bf16.msra.mxu0 0
    %436 = vmatprep.subr.bf16.mxu0 0
    %437 = vmatpush2.bf16.msra.mxu0 0
    %438 = vmatprep.mubr.bf16.mxu0 0
    %439 = vmatmul.mubr.bf16.gmra.mxu0 %v334
    %v440 = vpop.f32.mrf.mxu0
    %v441 = vadd.f32 %v356, %v440
    %v442 = vpop.f32.mrf.mxu0
    %v443 = vpop.f32.mrf.mxu0
    %v444 = vpop.f32.mrf.mxu0
    %445 = vdwg.mxu0
    %v446 = vmax.f32 %v441, 0.0
    %v447 = vpack.c.bf16 %v446, %v446
    %v448 = vld [vmem:[#allocation8] sm:$0xf]
    %v449 = vld [vmem:[#allocation8 + $0x4] sm:$0xf]
    %v450 = vld [vmem:[#allocation8 + $0x8] sm:$0xf]
    %v451 = vld [vmem:[#allocation8 + $0xc] sm:$0xf]
    %v452 = vld [vmem:[#allocation8 + $0x10] sm:$0xf]
    %v453 = vld [vmem:[#allocation8 + $0x14] sm:$0xf]
    %v454 = vld [vmem:[#allocation8 + $0x18] sm:$0xf]
    %v455 = vld [vmem:[#allocation8 + $0x1c] sm:$0xf]
    %v456 = vld [vmem:[#allocation8 + $0x20] sm:$0xf]
    %v457 = vld [vmem:[#allocation8 + $0x24] sm:$0xf]
    %v458 = vld [vmem:[#allocation8 + $0x28] sm:$0xf]
    %v459 = vld [vmem:[#allocation8 + $0x2c] sm:$0xf]
    %v460 = vld [vmem:[#allocation8 + $0x30] sm:$0xf]
    %v461 = vld [vmem:[#allocation8 + $0x34] sm:$0xf]
    %v462 = vld [vmem:[#allocation8 + $0x38] sm:$0xf]
    %v463 = vld [vmem:[#allocation8 + $0x3c] sm:$0xf]
    %v464 = vld [vmem:[%s8] sm:$0x1]
    %v466 = vlaneseq
    %v467 = vshrl.u32 %v466, 7
    %v468 = vsub.s32 0, %v467
    %v469 = vrot.slane %v464, %v468
    %v487 = vunpack.c.l.b16 %v448
    %v488 = vunpack.c.l.b16 %v449
    %v489 = vunpack.c.l.b16 %v450
    %v490 = vunpack.c.l.b16 %v451
    %v491 = vunpack.c.l.b16 %v452
    %v492 = vunpack.c.l.b16 %v453
    %v493 = vunpack.c.l.b16 %v454
    %v494 = vunpack.c.l.b16 %v455
    %v495 = vunpack.c.l.b16 %v456
    %v496 = vunpack.c.l.b16 %v457
    %v497 = vunpack.c.l.b16 %v458
    %v498 = vunpack.c.l.b16 %v459
    %v499 = vunpack.c.l.b16 %v460
    %v500 = vunpack.c.l.b16 %v461
    %v501 = vunpack.c.l.b16 %v462
    %v502 = vunpack.c.l.b16 %v463
    %v503 = vpack.c.b16 %v488, %v487
    %v504 = vpack.c.b16 %v490, %v489
    %v505 = vpack.c.b16 %v492, %v491
    %v506 = vpack.c.b16 %v494, %v493
    %v507 = vpack.c.b16 %v496, %v495
    %v508 = vpack.c.b16 %v498, %v497
    %v509 = vpack.c.b16 %v500, %v499
    %v510 = vpack.c.b16 %v502, %v501
    %519 = vmatprep.subr.bf16.mxu0 0
    %520 = vmatpush1.bf16.msra.mxu0 %v510
    %521 = vmatprep.subr.bf16.mxu0 0
    %522 = vmatpush1.bf16.msra.mxu0 %v509
    %523 = vmatprep.subr.bf16.mxu0 0
    %524 = vmatpush1.bf16.msra.mxu0 %v508
    %525 = vmatprep.subr.bf16.mxu0 0
    %526 = vmatpush1.bf16.msra.mxu0 %v507
    %527 = vmatprep.subr.bf16.mxu0 0
    %528 = vmatpush1.bf16.msra.mxu0 %v506
    %529 = vmatprep.subr.bf16.mxu0 0
    %530 = vmatpush1.bf16.msra.mxu0 %v505
    %531 = vmatprep.subr.bf16.mxu0 0
    %532 = vmatpush1.bf16.msra.mxu0 %v504
    %533 = vmatprep.subr.bf16.mxu0 0
    %534 = vmatpush1.bf16.msra.mxu0 %v503
    %535 = vmatprep.subr.bf16.mxu0 0
    %536 = vmatpush2.bf16.msra.mxu0 0
    %537 = vmatprep.subr.bf16.mxu0 0
    %538 = vmatpush2.bf16.msra.mxu0 0
    %539 = vmatprep.subr.bf16.mxu0 0
    %540 = vmatpush2.bf16.msra.mxu0 0
    %541 = vmatprep.subr.bf16.mxu0 0
    %542 = vmatpush2.bf16.msra.mxu0 0
    %543 = vmatprep.subr.bf16.mxu0 0
    %544 = vmatpush2.bf16.msra.mxu0 0
    %545 = vmatprep.subr.bf16.mxu0 0
    %546 = vmatpush2.bf16.msra.mxu0 0
    %547 = vmatprep.subr.bf16.mxu0 0
    %548 = vmatpush2.bf16.msra.mxu0 0
    %549 = vmatprep.subr.bf16.mxu0 0
    %550 = vmatpush2.bf16.msra.mxu0 0
    %551 = vmatprep.mubr.bf16.mxu0 0
    %552 = vmatmul.mubr.bf16.gmra.mxu0 %v447
    %v553 = vpop.f32.mrf.mxu0
    %v554 = vadd.f32 %v469, %v553
    %v555 = vpop.f32.mrf.mxu0
    %v556 = vpop.f32.mrf.mxu0
    %v557 = vpop.f32.mrf.mxu0
    %558 = vdwg.mxu0
    %v559 = vmax.f32 %v554, 0.0
    %v560 = vpack.c.bf16 %v559, %v559
    %v561 = vld [vmem:[#allocation10] sm:$0xf]
    %v562 = vld [vmem:[#allocation10 + $0x4] sm:$0xf]
    %v563 = vld [vmem:[#allocation10 + $0x8] sm:$0xf]
    %v564 = vld [vmem:[#allocation10 + $0xc] sm:$0xf]
    %v565 = vld [vmem:[#allocation10 + $0x10] sm:$0xf]
    %v566 = vld [vmem:[#allocation10 + $0x14] sm:$0xf]
    %v567 = vld [vmem:[#allocation10 + $0x18] sm:$0xf]
    %v568 = vld [vmem:[#allocation10 + $0x1c] sm:$0xf]
    %v569 = vld [vmem:[#allocation10 + $0x20] sm:$0xf]
    %v570 = vld [vmem:[#allocation10 + $0x24] sm:$0xf]
    %v571 = vld [vmem:[#allocation10 + $0x28] sm:$0xf]
    %v572 = vld [vmem:[#allocation10 + $0x2c] sm:$0xf]
    %v573 = vld [vmem:[#allocation10 + $0x30] sm:$0xf]
    %v574 = vld [vmem:[#allocation10 + $0x34] sm:$0xf]
    %v575 = vld [vmem:[#allocation10 + $0x38] sm:$0xf]
    %v576 = vld [vmem:[#allocation10 + $0x3c] sm:$0xf]
    %v577 = vld [vmem:[%s10] sm:$0x1]
    %v579 = vlaneseq
    %v580 = vshrl.u32 %v579, 7
    %v581 = vsub.s32 0, %v580
    %v582 = vrot.slane %v577, %v581
    %v600 = vunpack.c.l.b16 %v561
    %v601 = vunpack.c.l.b16 %v562
    %v602 = vunpack.c.l.b16 %v563
    %v603 = vunpack.c.l.b16 %v564
    %v604 = vunpack.c.l.b16 %v565
    %v605 = vunpack.c.l.b16 %v566
    %v606 = vunpack.c.l.b16 %v567
    %v607 = vunpack.c.l.b16 %v568
    %v608 = vunpack.c.l.b16 %v569
    %v609 = vunpack.c.l.b16 %v570
    %v610 = vunpack.c.l.b16 %v571
    %v611 = vunpack.c.l.b16 %v572
    %v612 = vunpack.c.l.b16 %v573
    %v613 = vunpack.c.l.b16 %v574
    %v614 = vunpack.c.l.b16 %v575
    %v615 = vunpack.c.l.b16 %v576
    %v616 = vpack.c.b16 %v601, %v600
    %v617 = vpack.c.b16 %v603, %v602
    %v618 = vpack.c.b16 %v605, %v604
    %v619 = vpack.c.b16 %v607, %v606
    %v620 = vpack.c.b16 %v609, %v608
    %v621 = vpack.c.b16 %v611, %v610
    %v622 = vpack.c.b16 %v613, %v612
    %v623 = vpack.c.b16 %v615, %v614
    %632 = vmatprep.subr.bf16.mxu0 0
    %633 = vmatpush1.bf16.msra.mxu0 %v623
    %634 = vmatprep.subr.bf16.mxu0 0
    %635 = vmatpush1.bf16.msra.mxu0 %v622
    %636 = vmatprep.subr.bf16.mxu0 0
    %637 = vmatpush1.bf16.msra.mxu0 %v621
    %638 = vmatprep.subr.bf16.mxu0 0
    %639 = vmatpush1.bf16.msra.mxu0 %v620
    %640 = vmatprep.subr.bf16.mxu0 0
    %641 = vmatpush1.bf16.msra.mxu0 %v619
    %642 = vmatprep.subr.bf16.mxu0 0
    %643 = vmatpush1.bf16.msra.mxu0 %v618
    %644 = vmatprep.subr.bf16.mxu0 0
    %645 = vmatpush1.bf16.msra.mxu0 %v617
    %646 = vmatprep.subr.bf16.mxu0 0
    %647 = vmatpush1.bf16.msra.mxu0 %v616
    %648 = vmatprep.subr.bf16.mxu0 0
    %649 = vmatpush2.bf16.msra.mxu0 0
    %650 = vmatprep.subr.bf16.mxu0 0
    %651 = vmatpush2.bf16.msra.mxu0 0
    %652 = vmatprep.subr.bf16.mxu0 0
    %653 = vmatpush2.bf16.msra.mxu0 0
    %654 = vmatprep.subr.bf16.mxu0 0
    %655 = vmatpush2.bf16.msra.mxu0 0
    %656 = vmatprep.subr.bf16.mxu0 0
    %657 = vmatpush2.bf16.msra.mxu0 0
    %658 = vmatprep.subr.bf16.mxu0 0
    %659 = vmatpush2.bf16.msra.mxu0 0
    %660 = vmatprep.subr.bf16.mxu0 0
    %661 = vmatpush2.bf16.msra.mxu0 0
    %662 = vmatprep.subr.bf16.mxu0 0
    %663 = vmatpush2.bf16.msra.mxu0 0
    %664 = vmatprep.mubr.bf16.mxu0 0
    %665 = vmatmul.mubr.bf16.gmra.mxu0 %v560
    %v666 = vpop.f32.mrf.mxu0
    %v667 = vadd.f32 %v582, %v666
    %v668 = vpop.f32.mrf.mxu0
    %v669 = vpop.f32.mrf.mxu0
    %v670 = vpop.f32.mrf.mxu0
    %671 = vdwg.mxu0
    %672 = vst [vmem:[#allocation11] sm:$0xff] %v667
    // Predicated region
    $region66: #{mlp_forward.1} parent=1 // pred_check
      _
    $region67: #{mlp_forward.1} parent=1 // pred_check_branch
      %674 = sbr.rel (0) target = $region69
    $region68: #{mlp_forward.1} parent=1 // pred_region
      %s676 = ssub.s32 128, 128
      %677 = vsyncadd [#allocation4], %s676
      %s679 = sshll.u32 [#allocation11], 4
      %s680 = int_to_ptr.vmem [resolvable:$true] %s679
      %682 = dma.vmem_to_hbm [thread:$0]  %s680, 128, %s11, [#allocation4]
    $region69: #{mlp_forward.1} parent=1 // pred_fallthru
      _
    // Predicated region
    $region70: #{mlp_forward.1} parent=1 // pred_check
      _
    $region71: #{mlp_forward.1} parent=1 // pred_check_branch
      %684 = sbr.rel (0) target = $region73
    $region72: #{mlp_forward.1} parent=1 // pred_region
      %685 = dma.done [#allocation4], 128
    $region73: #{mlp_forward.1} parent=1 // pred_fallthru
      _
    %686 = vsyncpa [#allocation3], 1
    %687 = vsyncpa [#allocation6], 1
    %688 = vsyncpa [#allocation9], 1
    %689 = vsyncpa [#allocation4], 1

</llo_original>
